<compile_context>
chip_gen: v5e
topology: v5e:2x2
jax: 0.10.0
libtpu: 0.0.40
codegen_flags: <defaults>
</compile_context>

<pallas_src>
import jax
import jax.numpy as jnp
from jax.experimental import pallas as pl
from jax.experimental.pallas import tpu as pltpu


def _round_up(x, m):
    return ((x + m - 1) // m) * m


def _sbp_kernel(x_ref, tri_ref, pi_ref):
    """Log-space stick breaking on one tile.

    x_ref:   [TR, L]  logits (f32)
    tri_ref: [L,  L]  strict-upper / block-diagonal mask (f32)
    pi_ref:  [TR, L]  stick-breaking weights (f32)
    """
    x = x_ref[...]

    # Shared softplus term: t = log1p(exp(-|x|))   (1 exp + 1 log1p on EUP)
    t = jnp.log1p(jnp.exp(-jnp.abs(x)))
    log_nu = -(jnp.maximum(-x, 0.0) + t)     # log(sigmoid(x)),     stable
    log1m_nu = -(jnp.maximum(x, 0.0) + t)    # log(1 - sigmoid(x)), stable

    # Exclusive cumulative sum within each K-group via one MXU matmul:
    #   excl[:, k] = sum_{j in same group, j%K < k%K} log1m_nu[:, j]
    excl = jnp.dot(log1m_nu, tri_ref[...], preferred_element_type=jnp.float32)

    pi_ref[...] = jnp.exp(log_nu + excl)     # single final exp on EUP


def stick_breaking_forward(logits, *, tile_rows=2048, tile_b=1024):
    """logits: [B, K] -> pi: [B, K] stick-breaking weights (forward only)."""
    B, K = logits.shape
    orig_dtype = logits.dtype
    x = logits.astype(jnp.float32)

    if 128 % K == 0:
        # ---------------- lane-dense path ----------------
        g = 128 // K                              # batch rows per 128-lane row
        # Pad B to a multiple of 8*g: makes the reshape exact and keeps the
        # row count a multiple of 8 (sublane tile).  Padded logits are 0
        # (sigmoid(0)=0.5, no NaN); padded rows are sliced off at the end.
        B_pad = _round_up(B, 8 * g)
        if B_pad != B:
            x = jnp.pad(x, ((0, B_pad - B), (0, 0)))
        R = B_pad // g                            # lane-dense rows
        x2 = x.reshape(R, 128)                    # pure row-major view

        tr = min(tile_rows, R)                    # multiple of 8, <= R
        grid = (pl.cdiv(R, tr),)

        # 128x128 block-diagonal mask: g copies of the strictly-upper KxK
        # triangle, so the exclusive cumsum stays confined to each K-group.
        idx = jnp.arange(128)
        tri = ((idx[:, None] // K == idx[None, :] // K) &
               (idx[:, None] % K < idx[None, :] % K)).astype(jnp.float32)

        cost = pl.CostEstimate(
            flops=2 * R * 128 * 128 + 6 * R * 128,
            transcendentals=3 * R * 128,
            bytes_accessed=2 * R * 128 * 4 + 128 * 128 * 4,
        )

        pi2 = pl.pallas_call(
            _sbp_kernel,
            out_shape=jax.ShapeDtypeStruct((R, 128), jnp.float32),
            grid=grid,
            in_specs=[
                pl.BlockSpec((tr, 128), lambda i: (i, 0)),    # logits tile
                pl.BlockSpec((128, 128), lambda i: (0, 0)),   # resident mask
            ],
            out_specs=pl.BlockSpec((tr, 128), lambda i: (i, 0)),
            compiler_params=pltpu.CompilerParams(
                dimension_semantics=("parallel",),
            ),
            cost_estimate=cost,
        )(x2, tri)

        pi = pi2.reshape(B_pad, K)[:B]
    else:
        # ---------------- fallback: batch-tiled [tb, K] ----------------
        B_pad = _round_up(B, 8)
        if B_pad != B:
            x = jnp.pad(x, ((0, B_pad - B), (0, 0)))
        tb = min(tile_b, B_pad)
        grid = (pl.cdiv(B_pad, tb),)

        idx = jnp.arange(K)
        tri = (idx[:, None] < idx[None, :]).astype(jnp.float32)

        cost = pl.CostEstimate(
            flops=2 * B_pad * K * K + 6 * B_pad * K,
            transcendentals=3 * B_pad * K,
            bytes_accessed=2 * B_pad * K * 4 + K * K * 4,
        )

        pi = pl.pallas_call(
            _sbp_kernel,
            out_shape=jax.ShapeDtypeStruct((B_pad, K), jnp.float32),
            grid=grid,
            in_specs=[
                pl.BlockSpec((tb, K), lambda i: (i, 0)),
                pl.BlockSpec((K, K), lambda i: (0, 0)),
            ],
            out_specs=pl.BlockSpec((tb, K), lambda i: (i, 0)),
            compiler_params=pltpu.CompilerParams(
                dimension_semantics=("parallel",),
            ),
            cost_estimate=cost,
        )(x, tri)[:B]

    return pi.astype(orig_dtype)


def stick_breaking_ref(logits):
    """Pure-JAX reference matching the PyTorch loop semantics."""
    nu = jax.nn.sigmoid(logits)
    one_minus = 1.0 - nu
    excl_cumprod = jnp.concatenate(
        [jnp.ones((logits.shape[0], 1), logits.dtype),
         jnp.cumprod(one_minus[:, :-1], axis=1)], axis=1)
    return nu * excl_cumprod


if __name__ == "__main__":
    n_components = 8
    batch = 32

    key = jax.random.PRNGKey(0)
    logits = jax.random.normal(key, (batch, n_components), jnp.float32) * 2.0

    pi = stick_breaking_forward(logits)
    jax.block_until_ready(pi)
    assert pi.shape == (batch, n_components)
    assert jnp.allclose(pi, stick_breaking_ref(logits),
                        atol=1e-5, rtol=1e-5), "small-batch mismatch"

    # Odd batch size -> exercises the padding path.
    logits_odd = jax.random.normal(jax.random.PRNGKey(1),
                                   (37, n_components), jnp.float32) * 2.0
    pi_odd = stick_breaking_forward(logits_odd)
    jax.block_until_ready(pi_odd)
    assert jnp.allclose(pi_odd, stick_breaking_ref(logits_odd),
                        atol=1e-5, rtol=1e-5), "odd-batch mismatch"

    # Larger batch with a small tile -> exercises the multi-step grid.
    logits_big = jax.random.normal(jax.random.PRNGKey(2),
                                   (4096, n_components), jnp.float32) * 2.0
    pi_big = stick_breaking_forward(logits_big, tile_rows=64)
    jax.block_until_ready(pi_big)
    assert jnp.allclose(pi_big, stick_breaking_ref(logits_big),
                        atol=1e-5, rtol=1e-5), "large-batch mismatch"

    # K that does not divide 128 -> exercises the fallback path.
    logits_k5 = jax.random.normal(jax.random.PRNGKey(3),
                                  (16, 5), jnp.float32) * 2.0
    pi_k5 = stick_breaking_forward(logits_k5)
    jax.block_until_ready(pi_k5)
    assert jnp.allclose(pi_k5, stick_breaking_ref(logits_k5),
                        atol=1e-5, rtol=1e-5), "fallback-path mismatch"

    print("KERNEL_OK")
</pallas_src>

<mosaic_0001>
module attributes {stable_mosaic.version = 11 : i64} {
  func.func @_sbp_kernel(%arg0: i32, %arg1: memref<8x128xf32, #tpu.memory_space<vmem>>, %arg2: memref<128x128xf32, #tpu.memory_space<vmem>>, %arg3: memref<8x128xf32, #tpu.memory_space<vmem>>) attributes {dimension_semantics = [#tpu.dimension_semantics<parallel>], iteration_bounds = array<i64: 1>, scalar_prefetch = 0 : i64, scratch_operands = 0 : i64, tpu.core_type = #tpu.core_type<tc>, window_params = [{transform_indices = @transform_0, window_bounds = array<i64: 8, 128>}, {pipeline_mode = #tpu.pipeline_mode<synchronous>, transform_indices = @transform_1, window_bounds = array<i64: 128, 128>}, {transform_indices = @transform_2, window_bounds = array<i64: 8, 128>}]} {
    %c0 = arith.constant 0 : index
    %c0_0 = arith.constant 0 : index
    %0 = vector.load %arg1[%c0, %c0_0] : memref<8x128xf32, #tpu.memory_space<vmem>>, vector<8x128xf32>
    %1 = math.absf %0 : vector<8x128xf32>
    %cst = arith.constant 0.000000e+00 : f32
    %2 = vector.broadcast %cst : f32 to vector<8x128xf32>
    %3 = arith.subf %2, %1 : vector<8x128xf32>
    %4 = math.exp %3 : vector<8x128xf32>
    %5 = math.log1p %4 : vector<8x128xf32>
    %cst_1 = arith.constant 0.000000e+00 : f32
    %6 = vector.broadcast %cst_1 : f32 to vector<8x128xf32>
    %7 = arith.subf %6, %0 : vector<8x128xf32>
    %cst_2 = arith.constant 0.000000e+00 : f32
    %8 = vector.broadcast %cst_2 : f32 to vector<8x128xf32>
    %9 = arith.maximumf %7, %8 : vector<8x128xf32>
    %10 = arith.addf %9, %5 : vector<8x128xf32>
    %cst_3 = arith.constant 0.000000e+00 : f32
    %11 = vector.broadcast %cst_3 : f32 to vector<8x128xf32>
    %12 = arith.subf %11, %10 : vector<8x128xf32>
    %cst_4 = arith.constant 0.000000e+00 : f32
    %13 = vector.broadcast %cst_4 : f32 to vector<8x128xf32>
    %14 = arith.maximumf %0, %13 : vector<8x128xf32>
    %15 = arith.addf %14, %5 : vector<8x128xf32>
    %cst_5 = arith.constant 0.000000e+00 : f32
    %16 = vector.broadcast %cst_5 : f32 to vector<8x128xf32>
    %17 = arith.subf %16, %15 : vector<8x128xf32>
    %c0_6 = arith.constant 0 : index
    %c0_7 = arith.constant 0 : index
    %18 = vector.load %arg2[%c0_6, %c0_7] : memref<128x128xf32, #tpu.memory_space<vmem>>, vector<128x128xf32>
    %cst_8 = arith.constant dense<0.000000e+00> : vector<8x128xf32>
    %19 = tpu.matmul %17, %18, %cst_8 {dimension_numbers = #tpu.dot_dimension_numbers<[1], [0], [0], [1], [0, 0, 1, 1], [], []>} : vector<8x128xf32>, vector<128x128xf32>, vector<8x128xf32> -> vector<8x128xf32>
    %20 = arith.addf %12, %19 : vector<8x128xf32>
    %21 = math.exp %20 : vector<8x128xf32>
    %c0_9 = arith.constant 0 : index
    %c0_10 = arith.constant 0 : index
    %22 = vector.load %arg3[%c0_9, %c0_10] : memref<8x128xf32, #tpu.memory_space<vmem>>, vector<8x128xf32>
    tpu.vector_store %arg3[%c0_9, %c0_10], %21 {strides = array<i32>} : memref<8x128xf32, #tpu.memory_space<vmem>>, vector<8x128xf32>,
    return
  }
  func.func @transform_0(%arg0: i32) -> (i32, i32) {
    %c0_i32 = arith.constant 0 : i32
    %c0_i32_0 = arith.constant 0 : i32
    return %arg0, %c0_i32 : i32, i32
  }
  func.func @transform_1(%arg0: i32) -> (i32, i32) {
    %c0_i32 = arith.constant 0 : i32
    %c0_i32_0 = arith.constant 0 : i32
    %c0_i32_1 = arith.constant 0 : i32
    return %c0_i32, %c0_i32_0 : i32, i32
  }
  func.func @transform_2(%arg0: i32) -> (i32, i32) {
    %c0_i32 = arith.constant 0 : i32
    %c0_i32_0 = arith.constant 0 : i32
    return %arg0, %c0_i32 : i32, i32
  }
}

</mosaic_0001>

<llo_original>
// kernel: tpu_custom_call.1
$region0: #{tpu_custom_call.1}
  #allocation0 [shape = 'u32[]', space=smem, size = 0x4, offset = 0x4, fixed_abs, tag = 'smem constant byte address 0x4 - core index']
  #allocation1 [shape = 'u32[72,128]{1,0:T(1,128)}', space=vmem, size = 0x9000, scoped, tag = 'internal scratch']
  %s0 = inlined_call_operand.hbm [shape: f32[8,128], index: 0, kind: input, shape index: {}]
  %s1 = inlined_call_operand.hbm [shape: f32[128,128], index: 1, kind: input, shape index: {}]
  %s2 = inlined_call_operand.hbm [shape: f32[8,128], index: 2, kind: output, shape index: {}]
  %s3 = sld [smem:[#allocation0]]
  $region26: #{tpu_custom_call.1} parent=0
    _
  %s5 = ssub.s32 1, %s3
  %s6 = scalar_select 0, %s5, %s3
  $region1: #{tpu_custom_call.1} parent=0
    #allocation2 [shape = 'u8[4096]{0}', space=vmem, size = 0x1000, scoped, tag = 'input window, operand 0, single buffered']
    #allocation3 [shape = 's32[1]{0}', space=sflag, size = 0x4, scoped, tag = 'scoped memory for tpu_custom_call.1']
    #allocation4 [shape = 's32[1]{0}', space=sflag, size = 0x4, scoped, tag = 'scoped memory for tpu_custom_call.1']
    #allocation5 [shape = 'u8[65536]{0}', space=vmem, size = 0x10000, scoped, tag = 'input window, operand 1, single buffered']
    #allocation6 [shape = 's32[1]{0}', space=sflag, size = 0x4, scoped, tag = 'scoped memory for tpu_custom_call.1']
    #allocation7 [shape = 'u8[4096]{0}', space=vmem, size = 0x1000, scoped, tag = 'output window, operand 0, single buffered']
    %7 = vsyncpa [#allocation3], 0
    %8 = vsyncpa [#allocation6], 0
    %9 = vsyncpa [#allocation4], 0
    // Predicated region
    $region2: #{tpu_custom_call.1} parent=1 // pred_check
      _
    $region3: #{tpu_custom_call.1} parent=1 // pred_check_branch
      %11 = sbr.rel (0) target = $region5
    $region4: #{tpu_custom_call.1} parent=1 // pred_region
      %13 = vsyncadd [#allocation3], 0
      %s15 = sshll.u32 %s0, 4
      %s16 = int_to_ptr.hbm [resolvable:$true] %s15
      %s17 = sshll.u32 [#allocation2], 4
      %s18 = int_to_ptr.vmem [resolvable:$true] %s17
      %20 = dma.hbm_to_vmem [thread:$0]  %s16, 128, %s18, [#allocation3]
    $region5: #{tpu_custom_call.1} parent=1 // pred_fallthru
      _
    // Predicated region
    $region6: #{tpu_custom_call.1} parent=1 // pred_check
      _
    $region7: #{tpu_custom_call.1} parent=1 // pred_check_branch
      %22 = sbr.rel (0) target = $region9
    $region8: #{tpu_custom_call.1} parent=1 // pred_region
      %24 = vsyncadd [#allocation6], 0
      %s25 = sshll.u32 %s1, 4
      %s26 = int_to_ptr.hbm [resolvable:$true] %s25
      %s27 = sshll.u32 [#allocation5], 4
      %s28 = int_to_ptr.vmem [resolvable:$true] %s27
      %33 = dma.hbm_to_vmem [thread:$0]  %s26, 2048, %s28, [#allocation6], 128, 128, 8
    $region9: #{tpu_custom_call.1} parent=1 // pred_fallthru
      _
    // Predicated region
    $region10: #{tpu_custom_call.1} parent=1 // pred_check
      _
    $region11: #{tpu_custom_call.1} parent=1 // pred_check_branch
      %35 = sbr.rel (0) target = $region13
    $region12: #{tpu_custom_call.1} parent=1 // pred_region
      %37 = dma.done [#allocation3], 128
    $region13: #{tpu_custom_call.1} parent=1 // pred_fallthru
      _
    // Predicated region
    $region14: #{tpu_custom_call.1} parent=1 // pred_check
      _
    $region15: #{tpu_custom_call.1} parent=1 // pred_check_branch
      %39 = sbr.rel (0) target = $region17
    $region16: #{tpu_custom_call.1} parent=1 // pred_region
      %41 = dma.done [#allocation6], 2048
    $region17: #{tpu_custom_call.1} parent=1 // pred_fallthru
      _
    %v42 = vld [vmem:[#allocation2] sm:$0xff]
    %v43 = vand.u32 2147483647, %v42
    %v44 = vsub.f32 0.0, %v43
    %v45 = vmul.f32 %v44, 1.442695
    %v46 = vpow.pop %v45
    %v47 = vadd.f32 %v46, 1.0
    %v48 = vlog2.pop %v47
    %v49 = vmul.f32 %v48, 0.6931472
    %v50 = vmul.f32 -0.5, %v46
    %v51 = vadd.f32 %v50, 1.0
    %v52 = vmul.f32 %v51, %v46
    %v53 = vand.u32 2147483647, %v46
    %vm54 = vcmp.lt.f32.partialorder %v53, 0.0004427343
    %v55 = vsel %vm54, %v52, %v49
    %v56 = vsub.f32 0.0, %v42
    %v57 = vmax.f32 %v56, 0.0
    %v58 = vadd.f32 %v57, %v55
    %v59 = vsub.f32 0.0, %v58
    %v60 = vmax.f32 %v42, 0.0
    %v61 = vadd.f32 %v60, %v55
    %v62 = vsub.f32 0.0, %v61
    %v63 = vld [vmem:[#allocation5] sm:$0xff]
    %v64 = vld [vmem:[#allocation5 + $0x8] sm:$0xff]
    %v65 = vld [vmem:[#allocation5 + $0x10] sm:$0xff]
    %v66 = vld [vmem:[#allocation5 + $0x18] sm:$0xff]
    %v67 = vld [vmem:[#allocation5 + $0x20] sm:$0xff]
    %v68 = vld [vmem:[#allocation5 + $0x28] sm:$0xff]
    %v69 = vld [vmem:[#allocation5 + $0x30] sm:$0xff]
    %v70 = vld [vmem:[#allocation5 + $0x38] sm:$0xff]
    %v71 = vld [vmem:[#allocation5 + $0x40] sm:$0xff]
    %v72 = vld [vmem:[#allocation5 + $0x48] sm:$0xff]
    %v73 = vld [vmem:[#allocation5 + $0x50] sm:$0xff]
    %v74 = vld [vmem:[#allocation5 + $0x58] sm:$0xff]
    %v75 = vld [vmem:[#allocation5 + $0x60] sm:$0xff]
    %v76 = vld [vmem:[#allocation5 + $0x68] sm:$0xff]
    %v77 = vld [vmem:[#allocation5 + $0x70] sm:$0xff]
    %v78 = vld [vmem:[#allocation5 + $0x78] sm:$0xff]
    %79 = vmatpush.msra.mxu0 %v78
    %80 = vmatpush.msra.mxu0 %v77
    %81 = vmatpush.msra.mxu0 %v76
    %82 = vmatpush.msra.mxu0 %v75
    %83 = vmatpush.msra.mxu0 %v74
    %84 = vmatpush.msra.mxu0 %v73
    %85 = vmatpush.msra.mxu0 %v72
    %86 = vmatpush.msra.mxu0 %v71
    %87 = vmatpush.msra.mxu0 %v70
    %88 = vmatpush.msra.mxu0 %v69
    %89 = vmatpush.msra.mxu0 %v68
    %90 = vmatpush.msra.mxu0 %v67
    %91 = vmatpush.msra.mxu0 %v66
    %92 = vmatpush.msra.mxu0 %v65
    %93 = vmatpush.msra.mxu0 %v64
    %94 = vmatpush.msra.mxu0 %v63
    %95 = vmatmul.f32.gmra.mxu0 %v62
    %v96 = vpop.f32.mrf.mxu0
    %v97 = vadd.f32 0.0, %v96
    %98 = vdwg.mxu0
    %v99 = vadd.f32 %v59, %v97
    %v100 = vmul.f32 %v99, 1.442695
    %v101 = vpow.pop %v100
    %102 = vst [vmem:[#allocation7] sm:$0xff] %v101
    // Predicated region
    $region18: #{tpu_custom_call.1} parent=1 // pred_check
      _
    $region19: #{tpu_custom_call.1} parent=1 // pred_check_branch
      %104 = sbr.rel (0) target = $region21
    $region20: #{tpu_custom_call.1} parent=1 // pred_region
      %106 = vsyncadd [#allocation4], 0
      %s108 = sshll.u32 [#allocation7], 4
      %s109 = int_to_ptr.vmem [resolvable:$true] %s108
      %s110 = sshll.u32 %s2, 4
      %s111 = int_to_ptr.hbm [resolvable:$true] %s110
      %113 = dma.vmem_to_hbm [thread:$0]  %s109, 128, %s111, [#allocation4]
    $region21: #{tpu_custom_call.1} parent=1 // pred_fallthru
      _
    // Predicated region
    $region22: #{tpu_custom_call.1} parent=1 // pred_check
      _
    $region23: #{tpu_custom_call.1} parent=1 // pred_check_branch
      %115 = sbr.rel (0) target = $region25
    $region24: #{tpu_custom_call.1} parent=1 // pred_region
      %117 = dma.done [#allocation4], 128
    $region25: #{tpu_custom_call.1} parent=1 // pred_fallthru
      _
    %118 = vsyncpa [#allocation3], 1
    %119 = vsyncpa [#allocation6], 1
    %120 = vsyncpa [#allocation4], 1

</llo_original>
